<compile_context>
chip_gen: v7x
topology: tpu7x:2x2x1
jax: 0.10.0
libtpu: 0.0.40
codegen_flags: <defaults>
</compile_context>

<pallas_src>
import math

import jax
import jax.numpy as jnp
from jax.experimental import pallas as pl
from jax.experimental.pallas import tpu as pltpu

HIDDEN = 64      # fixed by the PyTorch module: Conv2d(in_channels, 64, 1)
BN_EPS = 1e-5


# ----------------------------- Pallas kernel ---------------------------------
def _fused_embed_kernel(xc_ref, w1_ref, b1_ref, w2_ref, b2_ref, o_ref):
    """One (2C, TL) channel-major tile: both embed branches via block-diagonal weights.

    Rows 0:HIDDEN of h belong to the joint branch, HIDDEN:2*HIDDEN to the t_joint branch;
    same split for z over Cout.  Per-branch ReLU precedes the final branch sum.
    """
    xc = xc_ref[...]                                                    # (2C, TL)
    h = jnp.dot(w1_ref[...], xc, preferred_element_type=jnp.float32) + b1_ref[...]
    h = jnp.maximum(h, 0.0)                                             # (2*HIDDEN, TL)
    z = jnp.dot(w2_ref[...], h, preferred_element_type=jnp.float32) + b2_ref[...]
    z = jnp.maximum(z, 0.0)                                             # (2*Cout, TL)
    cout = o_ref.shape[0]
    o_ref[...] = (z[:cout, :] + z[cout:, :]).astype(o_ref.dtype)        # (Cout, TL)


def _run_kernel(xc, w1cat, b1cat, w2blk, b2cat, out_channels, lane_tile=512):
    """xc: (N, 2C, L) float32 (BN-normalized, channel-concatenated, channel-major)."""
    N, C2, L = xc.shape

    # Lane tile: multiple of 128, capped at `lane_tile`, adaptive to L.
    TL = min(lane_tile, pl.cdiv(L, 128) * 128)
    TL = max(128, (TL // 128) * 128)
    # v7x megacore: keep at least 2 parallel grid steps so both TensorCores get work.
    if N * pl.cdiv(L, TL) < 2 and TL > 128:
        TL = max(128, ((TL // 2) // 128) * 128)
    Lp = pl.cdiv(L, TL) * TL
    if Lp != L:
        xc = jnp.pad(xc, ((0, 0), (0, 0), (0, Lp - L)))
    num_l = Lp // TL

    H2 = w1cat.shape[0]          # 2 * HIDDEN
    O2 = w2blk.shape[0]          # 2 * out_channels

    out = pl.pallas_call(
        _fused_embed_kernel,
        out_shape=jax.ShapeDtypeStruct((N, out_channels, Lp), jnp.float32),
        grid_spec=pltpu.PrefetchScalarGridSpec(
            num_scalar_prefetch=0,
            grid=(N, num_l),
            in_specs=[
                pl.BlockSpec((None, C2, TL), lambda n, l: (n, 0, l)),   # activations
                pl.BlockSpec((H2, C2), lambda n, l: (0, 0)),            # fused W1 (block-diag)
                pl.BlockSpec((H2, 1), lambda n, l: (0, 0)),             # fused b1
                pl.BlockSpec((O2, H2), lambda n, l: (0, 0)),            # fused W2 (block-diag)
                pl.BlockSpec((O2, 1), lambda n, l: (0, 0)),             # fused b2
            ],
            out_specs=pl.BlockSpec((None, out_channels, TL), lambda n, l: (n, 0, l)),
        ),
        compiler_params=pltpu.CompilerParams(
            dimension_semantics=("parallel", "parallel")),
    )(xc, w1cat, b1cat, w2blk, b2cat)

    if Lp != L:
        out = out[:, :, :L]
    return out


# ------------------------------ JAX glue --------------------------------------
def _bn_train(x, gamma, beta, eps=BN_EPS):
    """BatchNorm1d over C*V channels of x:(N,C,V,T); training-mode batch stats over (N,T)."""
    mean = jnp.mean(x, axis=(0, 3), keepdims=True)
    var = jnp.mean((x - mean) ** 2, axis=(0, 3), keepdims=True)   # biased, as PyTorch forward
    g = gamma.reshape(1, x.shape[1], x.shape[2], 1)
    b = beta.reshape(1, x.shape[1], x.shape[2], 1)
    return (x - mean) * jax.lax.rsqrt(var + eps) * g + b


def _block_diag(a, b):
    ra, ca = a.shape
    rb, cb = b.shape
    top = jnp.concatenate([a, jnp.zeros((ra, cb), a.dtype)], axis=1)
    bot = jnp.concatenate([jnp.zeros((rb, ca), b.dtype), b], axis=1)
    return jnp.concatenate([top, bot], axis=0)


def block_joint_input_forward(x, params, mode=2):
    # TODO(synk): only the default mode=2 (joint + t_joint) is implemented; modes 0/1
    # would simply drop one branch of the fused weights.
    assert mode == 2
    N, C, V, T = x.shape
    L = V * T

    t_jpt = jnp.concatenate(
        [jnp.zeros((N, C, V, 1), x.dtype), x[:, :, :, 1:] - x[:, :, :, :-1]], axis=-1)

    x1n = _bn_train(x, params["bn_j_gamma"], params["bn_j_beta"])
    x2n = _bn_train(t_jpt, params["bn_t_gamma"], params["bn_t_beta"])
    # Channel-major, no transposes: (N, 2C, V*T).
    xc = jnp.concatenate([x1n.reshape(N, C, L), x2n.reshape(N, C, L)], axis=1)

    # Fuse the 8 small conv weights/biases into 4 arrays (block-diagonal structure keeps
    # the two branches independent until the final post-ReLU sum).
    w1cat = _block_diag(params["w1_j"], params["w1_t"])                       # (2H, 2C)
    b1cat = jnp.concatenate([params["b1_j"], params["b1_t"]]).reshape(-1, 1)  # (2H, 1)
    w2blk = _block_diag(params["w2_j"], params["w2_t"])                       # (2Cout, 2H)
    b2cat = jnp.concatenate([params["b2_j"], params["b2_t"]]).reshape(-1, 1)  # (2Cout, 1)
    out_channels = params["w2_j"].shape[0]

    out = _run_kernel(xc, w1cat, b1cat, w2blk, b2cat, out_channels)
    return out.reshape(N, out_channels, V, T)


# Pure-JAX reference for verification.
def reference_forward(x, params):
    N, C, V, T = x.shape
    t_jpt = jnp.concatenate(
        [jnp.zeros((N, C, V, 1), x.dtype), x[:, :, :, 1:] - x[:, :, :, :-1]], axis=-1)

    def embed(a, gamma, beta, w1, b1, w2, b2):
        a = _bn_train(a, gamma, beta)
        h = jnp.einsum('ncvt,hc->nhvt', a, w1) + b1[None, :, None, None]
        h = jnp.maximum(h, 0.0)
        y = jnp.einsum('nhvt,oh->novt', h, w2) + b2[None, :, None, None]
        return jnp.maximum(y, 0.0)

    y1 = embed(x, params["bn_j_gamma"], params["bn_j_beta"],
               params["w1_j"], params["b1_j"], params["w2_j"], params["b2_j"])
    y2 = embed(t_jpt, params["bn_t_gamma"], params["bn_t_beta"],
               params["w1_t"], params["b1_t"], params["w2_t"], params["b2_t"])
    return y1 + y2


# ---------------------------- parameter init ----------------------------------
def init_params(key, in_channels=3, out_channels=64, num_node=25):
    ks = jax.random.split(key, 8)

    def conv(kw, kb, cin, cout):
        bound = 1.0 / math.sqrt(cin)                     # 1x1 conv: fan_in = cin
        w = jax.random.uniform(kw, (cout, cin), jnp.float32, -bound, bound)  # PyTorch (out, in)
        b = jax.random.uniform(kb, (cout,), jnp.float32, -bound, bound)
        return w, b

    w1j, b1j = conv(ks[0], ks[1], in_channels, HIDDEN)
    w2j, b2j = conv(ks[2], ks[3], HIDDEN, out_channels)
    w1t, b1t = conv(ks[4], ks[5], in_channels, HIDDEN)
    w2t, b2t = conv(ks[6], ks[7], HIDDEN, out_channels)

    nchan = in_channels * num_node
    return dict(
        bn_j_gamma=jnp.ones((nchan,), jnp.float32), bn_j_beta=jnp.zeros((nchan,), jnp.float32),
        bn_t_gamma=jnp.ones((nchan,), jnp.float32), bn_t_beta=jnp.zeros((nchan,), jnp.float32),
        w1_j=w1j, b1_j=b1j, w2_j=w2j, b2_j=b2j,
        w1_t=w1t, b1_t=b1t, w2_t=w2t, b2_t=b2t,
    )


if __name__ == "__main__":
    # norm_data is BatchNorm1d(3*25) => V must be 25 (the skeleton joint count).
    N, C, V, T = 2, 3, 25, 8
    out_channels = 64

    key = jax.random.PRNGKey(0)
    kx, kp = jax.random.split(key)
    x = jax.random.normal(kx, (N, C, V, T), jnp.float32)
    params = init_params(kp, in_channels=C, out_channels=out_channels, num_node=V)

    out = jax.block_until_ready(jax.jit(block_joint_input_forward)(x, params))
    ref = jax.block_until_ready(jax.jit(reference_forward)(x, params))

    assert out.shape == (N, out_channels, V, T), out.shape
    err = float(jnp.max(jnp.abs(out - ref)))
    assert jnp.allclose(out, ref, atol=1e-4, rtol=1e-4), err
    print("KERNEL_OK")
</pallas_src>

<mosaic_0001>
module attributes {stable_mosaic.version = 11 : i64} {
  func.func @_fused_embed_kernel(%arg0: i32, %arg1: i32, %arg2: memref<1x6x256xf32, #tpu.memory_space<vmem>>, %arg3: memref<128x6xf32, #tpu.memory_space<vmem>>, %arg4: memref<128x1xf32, #tpu.memory_space<vmem>>, %arg5: memref<128x128xf32, #tpu.memory_space<vmem>>, %arg6: memref<128x1xf32, #tpu.memory_space<vmem>>, %arg7: memref<1x64x256xf32, #tpu.memory_space<vmem>>) attributes {dimension_semantics = [#tpu.dimension_semantics<parallel>, #tpu.dimension_semantics<parallel>], iteration_bounds = array<i64: 2, 1>, scalar_prefetch = 0 : i64, scratch_operands = 0 : i64, tpu.core_type = #tpu.core_type<tc>, window_params = [{transform_indices = @transform_0, window_bounds = array<i64: 1, 6, 256>}, {pipeline_mode = #tpu.pipeline_mode<synchronous>, transform_indices = @transform_1, window_bounds = array<i64: 128, 6>}, {pipeline_mode = #tpu.pipeline_mode<synchronous>, transform_indices = @transform_2, window_bounds = array<i64: 128, 1>}, {pipeline_mode = #tpu.pipeline_mode<synchronous>, transform_indices = @transform_3, window_bounds = array<i64: 128, 128>}, {pipeline_mode = #tpu.pipeline_mode<synchronous>, transform_indices = @transform_4, window_bounds = array<i64: 128, 1>}, {transform_indices = @transform_5, window_bounds = array<i64: 1, 64, 256>}]} {
    %c0 = arith.constant 0 : index
    %c0_0 = arith.constant 0 : index
    %c0_1 = arith.constant 0 : index
    %0 = vector.load %arg2[%c0, %c0_0, %c0_1] : memref<1x6x256xf32, #tpu.memory_space<vmem>>, vector<1x6x256xf32>
    %1 = vector.shape_cast %0 : vector<1x6x256xf32> to vector<6x256xf32>
    %c0_2 = arith.constant 0 : index
    %c0_3 = arith.constant 0 : index
    %2 = vector.load %arg3[%c0_2, %c0_3] : memref<128x6xf32, #tpu.memory_space<vmem>>, vector<128x6xf32>
    %cst = arith.constant dense<0.000000e+00> : vector<128x256xf32>
    %3 = tpu.matmul %2, %1, %cst {dimension_numbers = #tpu.dot_dimension_numbers<[1], [0], [0], [1], [0, 0, 1, 1], [], []>} : vector<128x6xf32>, vector<6x256xf32>, vector<128x256xf32> -> vector<128x256xf32>
    %c0_4 = arith.constant 0 : index
    %c0_5 = arith.constant 0 : index
    %4 = vector.load %arg4[%c0_4, %c0_5] : memref<128x1xf32, #tpu.memory_space<vmem>>, vector<128x1xf32>
    %5 = vector.broadcast %4 : vector<128x1xf32> to vector<128x256xf32>
    %6 = arith.addf %3, %5 : vector<128x256xf32>
    %cst_6 = arith.constant 0.000000e+00 : f32
    %7 = vector.broadcast %cst_6 : f32 to vector<128x256xf32>
    %8 = arith.maximumf %6, %7 : vector<128x256xf32>
    %c0_7 = arith.constant 0 : index
    %c0_8 = arith.constant 0 : index
    %9 = vector.load %arg5[%c0_7, %c0_8] : memref<128x128xf32, #tpu.memory_space<vmem>>, vector<128x128xf32>
    %cst_9 = arith.constant dense<0.000000e+00> : vector<128x256xf32>
    %10 = tpu.matmul %9, %8, %cst_9 {dimension_numbers = #tpu.dot_dimension_numbers<[1], [0], [0], [1], [0, 0, 1, 1], [], []>} : vector<128x128xf32>, vector<128x256xf32>, vector<128x256xf32> -> vector<128x256xf32>
    %c0_10 = arith.constant 0 : index
    %c0_11 = arith.constant 0 : index
    %11 = vector.load %arg6[%c0_10, %c0_11] : memref<128x1xf32, #tpu.memory_space<vmem>>, vector<128x1xf32>
    %12 = vector.broadcast %11 : vector<128x1xf32> to vector<128x256xf32>
    %13 = arith.addf %10, %12 : vector<128x256xf32>
    %cst_12 = arith.constant 0.000000e+00 : f32
    %14 = vector.broadcast %cst_12 : f32 to vector<128x256xf32>
    %15 = arith.maximumf %13, %14 : vector<128x256xf32>
    %16 = vector.extract_strided_slice %15 {offsets = [0, 0], sizes = [64, 256], strides = [1, 1]} : vector<128x256xf32> to vector<64x256xf32>
    %17 = vector.extract_strided_slice %15 {offsets = [64, 0], sizes = [64, 256], strides = [1, 1]} : vector<128x256xf32> to vector<64x256xf32>
    %18 = arith.addf %16, %17 : vector<64x256xf32>
    %c0_13 = arith.constant 0 : index
    %c0_14 = arith.constant 0 : index
    %c0_15 = arith.constant 0 : index
    %19 = vector.load %arg7[%c0_13, %c0_14, %c0_15] : memref<1x64x256xf32, #tpu.memory_space<vmem>>, vector<1x64x256xf32>
    %20 = vector.shape_cast %19 : vector<1x64x256xf32> to vector<64x256xf32>
    %21 = vector.shape_cast %18 : vector<64x256xf32> to vector<1x64x256xf32>
    tpu.vector_store %arg7[%c0_13, %c0_14, %c0_15], %21 {strides = array<i32>} : memref<1x64x256xf32, #tpu.memory_space<vmem>>, vector<1x64x256xf32>,
    return
  }
  func.func @transform_0(%arg0: i32, %arg1: i32) -> (i32, i32, i32) {
    %c0_i32 = arith.constant 0 : i32
    %c0_i32_0 = arith.constant 0 : i32
    return %arg0, %c0_i32, %arg1 : i32, i32, i32
  }
  func.func @transform_1(%arg0: i32, %arg1: i32) -> (i32, i32) {
    %c0_i32 = arith.constant 0 : i32
    %c0_i32_0 = arith.constant 0 : i32
    %c0_i32_1 = arith.constant 0 : i32
    return %c0_i32, %c0_i32_0 : i32, i32
  }
  func.func @transform_2(%arg0: i32, %arg1: i32) -> (i32, i32) {
    %c0_i32 = arith.constant 0 : i32
    %c0_i32_0 = arith.constant 0 : i32
    %c0_i32_1 = arith.constant 0 : i32
    return %c0_i32, %c0_i32_0 : i32, i32
  }
  func.func @transform_3(%arg0: i32, %arg1: i32) -> (i32, i32) {
    %c0_i32 = arith.constant 0 : i32
    %c0_i32_0 = arith.constant 0 : i32
    %c0_i32_1 = arith.constant 0 : i32
    return %c0_i32, %c0_i32_0 : i32, i32
  }
  func.func @transform_4(%arg0: i32, %arg1: i32) -> (i32, i32) {
    %c0_i32 = arith.constant 0 : i32
    %c0_i32_0 = arith.constant 0 : i32
    %c0_i32_1 = arith.constant 0 : i32
    return %c0_i32, %c0_i32_0 : i32, i32
  }
  func.func @transform_5(%arg0: i32, %arg1: i32) -> (i32, i32, i32) {
    %c0_i32 = arith.constant 0 : i32
    %c0_i32_0 = arith.constant 0 : i32
    return %arg0, %c0_i32, %arg1 : i32, i32, i32
  }
}

</mosaic_0001>

<llo_original>
// kernel: block_joint_input_forward.1
$region0: #{block_joint_input_forward.1}
  #allocation0 [shape = 'u32[]', space=smem, size = 0x4, offset = 0x4, fixed_abs, tag = 'smem constant byte address 0x4 - core index']
  #allocation1 [shape = 'u32[144,128]{1,0:T(1,128)}', space=vmem, size = 0x12000, scoped, tag = 'internal scratch']
  %s0 = inlined_call_operand.vmem [shape: f32[2,6,256], index: 0, kind: input, shape index: {}]
  %s1 = inlined_call_operand.vmem [shape: f32[128,6], index: 1, kind: input, shape index: {}]
  %s2 = inlined_call_operand.vmem [shape: f32[128,1], index: 2, kind: input, shape index: {}]
  %s3 = inlined_call_operand.vmem [shape: f32[128,128], index: 3, kind: input, shape index: {}]
  %s4 = inlined_call_operand.vmem [shape: f32[128,1], index: 4, kind: input, shape index: {}]
  %s5 = inlined_call_operand.vmem [shape: f32[2,64,256], index: 5, kind: output, shape index: {}]
  %s6 = sld [smem:[#allocation0]]
  $region53: #{block_joint_input_forward.1} parent=0
    _
  %s8 = ssub.s32 1, %s6
  %s9 = scalar_select 0, %s8, %s6
  loop: start=0, step=1, limit=4
  $region2: #{block_joint_input_forward.1} parent=0 // loop_pre_header
    _
  $region3: #{block_joint_input_forward.1} parent=0 // loop_header
    %s11 = sphi 0, %s15
    %p12 = scmp.ge.s32.totalorder %s11, 4
    %s18 = sphi 0, %s30
    %s19 = sphi 0, %s26
    %s20 = sphi 0, %s18
    %s21 = sphi 0, %s19
    %s22 = sphi 0, %s20
    %s23 = sphi 0, %s21
    %s35 = sphi 0, %s37
    %s38 = sphi 0, %s35
    %s39 = sphi 0, %s38
    %s55 = sphi 0, %s39
    %s59 = sphi 0, %s59
    %s61 = sphi 0, %s59
    %s62 = sphi 0, %s61
    %s76 = sphi 0, %s62
    %s80 = sphi 0, %s80
    %s82 = sphi 0, %s80
    %s83 = sphi 0, %s82
    %s97 = sphi 0, %s83
    %s101 = sphi 0, %s101
    %s103 = sphi 0, %s101
    %s104 = sphi 0, %s103
    %s118 = sphi 0, %s104
    %s122 = sphi 0, %s122
    %s124 = sphi 0, %s122
    %s125 = sphi 0, %s124
    %s139 = sphi 0, %s125
    %s147 = sphi 0, %s149
    %s150 = sphi 0, %s147
    %s151 = sphi 0, %s150
    %s167 = sphi 0, %s151
  $region4: #{block_joint_input_forward.1} parent=0 // loop_header_branch
    %14 = sbr.rel (%p12) target = $region8
  $region5: #{block_joint_input_forward.1} parent=0 // loop_body
    %s16 = ssub.s32 %s11, 1
    %s17 = ssub.s32 %s11, 2
    %s24 = sadd.s32 1, %s19
    %p25 = scmp.ge.s32.totalorder %s24, 1
    %s26 = scalar_select %p25, 0, %s24
    %s27 = sadd.s32 1, %s18
    %s28 = scalar_select %p25, %s27, %s18
    %p29 = scmp.ge.s32.totalorder %s28, 2
    %s30 = scalar_select %p29, 0, %s28
    %s31 = ssub.s32 %s18, %s30
    %s32 = ssub.s32 %s19, %s26
    %s33 = sor.u32 %s31, %s32
    %p34 = scmp.eq.s32.totalorder %s33, 0
    %s36 = sadd.s32 %s35, 1
    %s37 = scalar_select %p34, %s35, %s36
    %p40 = pneg %p34
    %p41 = scmp.eq.s32.totalorder %s11, 1
    %p42 = por %p40, %p41
    %p43 = scmp.ne.s32.totalorder %s35, %s38
    %p44 = scmp.eq.s32.totalorder %s11, 0
    %p45 = por %p43, %p44
    %p46 = scmp.ne.s32.totalorder %s35, %s38
    %p47 = scmp.eq.s32.totalorder %s16, 1
    %p48 = por %p46, %p47
    %p49 = scmp.ne.s32.totalorder %s38, %s39
    %p50 = scmp.eq.s32.totalorder %s16, 0
    %p51 = por %p49, %p50
    %p52 = scmp.ne.s32.totalorder %s38, %s39
    %p53 = scmp.eq.s32.totalorder %s17, 1
    %p54 = por %p52, %p53
    %p56 = scmp.ne.s32.totalorder %s39, %s55
    %p57 = scmp.eq.s32.totalorder %s17, 0
    %p58 = por %p56, %p57
    %s60 = sadd.s32 %s59, 1
    %p63 = scmp.eq.s32.totalorder %s11, 1
    %p64 = scmp.ne.s32.totalorder %s59, %s61
    %p65 = scmp.eq.s32.totalorder %s11, 0
    %p66 = por %p64, %p65
    %p67 = scmp.ne.s32.totalorder %s59, %s61
    %p68 = scmp.eq.s32.totalorder %s16, 1
    %p69 = por %p67, %p68
    %p70 = scmp.ne.s32.totalorder %s61, %s62
    %p71 = scmp.eq.s32.totalorder %s16, 0
    %p72 = por %p70, %p71
    %p73 = scmp.ne.s32.totalorder %s61, %s62
    %p74 = scmp.eq.s32.totalorder %s17, 1
    %p75 = por %p73, %p74
    %p77 = scmp.ne.s32.totalorder %s62, %s76
    %p78 = scmp.eq.s32.totalorder %s17, 0
    %p79 = por %p77, %p78
    %s81 = sadd.s32 %s80, 1
    %p84 = scmp.eq.s32.totalorder %s11, 1
    %p85 = scmp.ne.s32.totalorder %s80, %s82
    %p86 = scmp.eq.s32.totalorder %s11, 0
    %p87 = por %p85, %p86
    %p88 = scmp.ne.s32.totalorder %s80, %s82
    %p89 = scmp.eq.s32.totalorder %s16, 1
    %p90 = por %p88, %p89
    %p91 = scmp.ne.s32.totalorder %s82, %s83
    %p92 = scmp.eq.s32.totalorder %s16, 0
    %p93 = por %p91, %p92
    %p94 = scmp.ne.s32.totalorder %s82, %s83
    %p95 = scmp.eq.s32.totalorder %s17, 1
    %p96 = por %p94, %p95
    %p98 = scmp.ne.s32.totalorder %s83, %s97
    %p99 = scmp.eq.s32.totalorder %s17, 0
    %p100 = por %p98, %p99
    %s102 = sadd.s32 %s101, 1
    %p105 = scmp.eq.s32.totalorder %s11, 1
    %p106 = scmp.ne.s32.totalorder %s101, %s103
    %p107 = scmp.eq.s32.totalorder %s11, 0
    %p108 = por %p106, %p107
    %p109 = scmp.ne.s32.totalorder %s101, %s103
    %p110 = scmp.eq.s32.totalorder %s16, 1
    %p111 = por %p109, %p110
    %p112 = scmp.ne.s32.totalorder %s103, %s104
    %p113 = scmp.eq.s32.totalorder %s16, 0
    %p114 = por %p112, %p113
    %p115 = scmp.ne.s32.totalorder %s103, %s104
    %p116 = scmp.eq.s32.totalorder %s17, 1
    %p117 = por %p115, %p116
    %p119 = scmp.ne.s32.totalorder %s104, %s118
    %p120 = scmp.eq.s32.totalorder %s17, 0
    %p121 = por %p119, %p120
    %s123 = sadd.s32 %s122, 1
    %p126 = scmp.eq.s32.totalorder %s11, 1
    %p127 = scmp.ne.s32.totalorder %s122, %s124
    %p128 = scmp.eq.s32.totalorder %s11, 0
    %p129 = por %p127, %p128
    %p130 = scmp.ne.s32.totalorder %s122, %s124
    %p131 = scmp.eq.s32.totalorder %s16, 1
    %p132 = por %p130, %p131
    %p133 = scmp.ne.s32.totalorder %s124, %s125
    %p134 = scmp.eq.s32.totalorder %s16, 0
    %p135 = por %p133, %p134
    %p136 = scmp.ne.s32.totalorder %s124, %s125
    %p137 = scmp.eq.s32.totalorder %s17, 1
    %p138 = por %p136, %p137
    %p140 = scmp.ne.s32.totalorder %s125, %s139
    %p141 = scmp.eq.s32.totalorder %s17, 0
    %p142 = por %p140, %p141
    %s143 = ssub.s32 %s18, %s30
    %s144 = ssub.s32 %s19, %s26
    %s145 = sor.u32 %s143, %s144
    %p146 = scmp.eq.s32.totalorder %s145, 0
    %s148 = sadd.s32 %s147, 1
    %s149 = scalar_select %p146, %s147, %s148
    %p152 = pneg %p146
    %p153 = scmp.eq.s32.totalorder %s11, 1
    %p154 = por %p152, %p153
    %p155 = scmp.ne.s32.totalorder %s147, %s150
    %p156 = scmp.eq.s32.totalorder %s11, 0
    %p157 = por %p155, %p156
    %p158 = scmp.ne.s32.totalorder %s147, %s150
    %p159 = scmp.eq.s32.totalorder %s16, 1
    %p160 = por %p158, %p159
    %p161 = scmp.ne.s32.totalorder %s150, %s151
    %p162 = scmp.eq.s32.totalorder %s16, 0
    %p163 = por %p161, %p162
    %p164 = scmp.ne.s32.totalorder %s150, %s151
    %p165 = scmp.eq.s32.totalorder %s17, 1
    %p166 = por %p164, %p165
    %p168 = scmp.ne.s32.totalorder %s151, %s167
    %p169 = scmp.eq.s32.totalorder %s17, 0
    %p170 = por %p168, %p169
    %p171 = scmp.le.s32.totalorder 1, %s11
    %p172 = scmp.lt.s32.totalorder %s11, 3
    %p173 = pnand %p171, %p172
    %p174 = pneg %p173
    // Predicated region
    $region9: #{block_joint_input_forward.1} parent=5 // pred_check
      _
    $region10: #{block_joint_input_forward.1} parent=5 // pred_check_branch
      %176 = sbr.rel (%p173) target = $region12
    $region11: #{block_joint_input_forward.1} parent=5 // pred_region
      %s177 = ssub.s32 %s11, 1
      // Predicated region
      $region13: #{block_joint_input_forward.1} parent=11 // pred_check
        %p178 = pneg %p72
      $region14: #{block_joint_input_forward.1} parent=11 // pred_check_branch
        %180 = sbr.rel (%p178) target = $region16
      $region15: #{block_joint_input_forward.1} parent=11 // pred_region
        _
      $region16: #{block_joint_input_forward.1} parent=11 // pred_fallthru
        _
      // Predicated region
      $region17: #{block_joint_input_forward.1} parent=11 // pred_check
        %p181 = pneg %p93
      $region18: #{block_joint_input_forward.1} parent=11 // pred_check_branch
        %183 = sbr.rel (%p181) target = $region20
      $region19: #{block_joint_input_forward.1} parent=11 // pred_region
        _
      $region20: #{block_joint_input_forward.1} parent=11 // pred_fallthru
        _
      // Predicated region
      $region21: #{block_joint_input_forward.1} parent=11 // pred_check
        %p184 = pneg %p114
      $region22: #{block_joint_input_forward.1} parent=11 // pred_check_branch
        %186 = sbr.rel (%p184) target = $region24
      $region23: #{block_joint_input_forward.1} parent=11 // pred_region
        _
      $region24: #{block_joint_input_forward.1} parent=11 // pred_fallthru
        _
      // Predicated region
      $region25: #{block_joint_input_forward.1} parent=11 // pred_check
        %p187 = pneg %p135
      $region26: #{block_joint_input_forward.1} parent=11 // pred_check_branch
        %189 = sbr.rel (%p187) target = $region28
      $region27: #{block_joint_input_forward.1} parent=11 // pred_region
        _
      $region28: #{block_joint_input_forward.1} parent=11 // pred_fallthru
        _
    $region12: #{block_joint_input_forward.1} parent=5 // pred_fallthru
      _
    %p190 = scmp.lt.s32.totalorder %s11, 2
    // Predicated region
    $region29: #{block_joint_input_forward.1} parent=5 // pred_check
      %p191 = pneg %p190
    $region30: #{block_joint_input_forward.1} parent=5 // pred_check_branch
      %193 = sbr.rel (%p191) target = $region32
    $region31: #{block_joint_input_forward.1} parent=5 // pred_region
      // Predicated region
      $region33: #{block_joint_input_forward.1} parent=31 // pred_check
        %p194 = pneg %p45
      $region34: #{block_joint_input_forward.1} parent=31 // pred_check_branch
        %196 = sbr.rel (%p194) target = $region36
      $region35: #{block_joint_input_forward.1} parent=31 // pred_region
        %s197 = smul.u32 2, %s19
        %p198 = scmp.lt.s32.totalorder %s18, 1
        %s199 = scalar_select %p198, %s18, 1
        %p200 = scmp.lt.s32.totalorder %s197, 1
        %s201 = scalar_select %p200, %s197, 1
        %s202 = smul.addr %s199, 2
        %s203 = sadd.s32 %s201, %s202
        %s204 = smul.addr %s203, 8
        %s205 = scalar_lea.vmem %s0, %s204
        %s206 = smul.u32 2, %s19
      $region36: #{block_joint_input_forward.1} parent=31 // pred_fallthru
        _
    $region32: #{block_joint_input_forward.1} parent=5 // pred_fallthru
      _
    %p207 = scmp.le.s32.totalorder 1, %s11
    %p208 = scmp.lt.s32.totalorder %s11, 3
    %p209 = pnand %p207, %p208
    %p210 = pneg %p209
    // Predicated region
    $region37: #{block_joint_input_forward.1} parent=5 // pred_check
      _
    $region38: #{block_joint_input_forward.1} parent=5 // pred_check_branch
      %212 = sbr.rel (%p209) target = $region40
    $region39: #{block_joint_input_forward.1} parent=5 // pred_region
      %s213 = ssub.s32 %s11, 1
      %s214 = smul.u32 2, %s21
      %p215 = scmp.lt.s32.totalorder %s20, 1
      %s216 = scalar_select %p215, %s20, 1
      %p217 = scmp.lt.s32.totalorder %s214, 1
      %s218 = scalar_select %p217, %s214, 1
      %s219 = smul.addr %s216, 2
      %s220 = sadd.s32 %s218, %s219
      %s221 = smul.addr %s220, 8
      %s222 = scalar_lea.vmem %s0, %s221
      %p223 = pneg %p51
      %p224 = pneg %p48
      %p225 = pneg %p72
      %p226 = pneg %p69
      %p227 = pneg %p93
      %p228 = pneg %p90
      %p229 = pneg %p114
      %p230 = pneg %p111
      %p231 = pneg %p135
      %p232 = pneg %p132
      %p233 = pneg %p163
      %p234 = pneg %p160
      %s235 = smul.u32 2, %s21
      %p236 = scmp.lt.s32.totalorder %s20, 1
      %s237 = scalar_select %p236, %s20, 1
      %p238 = scmp.lt.s32.totalorder %s235, 1
      %s239 = scalar_select %p238, %s235, 1
      %s240 = smul.addr %s237, 16
      %s241 = sadd.s32 %s239, %s240
      %s242 = smul.addr %s241, 8
      %s243 = scalar_lea.vmem %s5, %s242
      %s244 = smul.u32 2, %s21
      %p245 = scmp.lt.s32.totalorder %s20, 1
      %s246 = scalar_select %p245, %s20, 1
      %p247 = scmp.lt.s32.totalorder %s244, 1
      %s248 = scalar_select %p247, %s244, 1
      %s249 = smul.addr %s246, 2
      %s250 = sadd.s32 %s248, %s249
      %s251 = smul.addr %s250, 8
      %s252 = scalar_lea.vmem %s0, %s251
      %s253 = smul.u32 2, %s21
      %s254 = smul.u32 2, %s21
      %p255 = scmp.lt.s32.totalorder %s20, 1
      %s256 = scalar_select %p255, %s20, 1
      %p257 = scmp.lt.s32.totalorder %s254, 1
      %s258 = scalar_select %p257, %s254, 1
      %s259 = smul.addr %s256, 16
      %s260 = sadd.s32 %s258, %s259
      %s261 = smul.addr %s260, 8
      %s262 = scalar_lea.vmem %s5, %s261
      %s263 = smul.u32 2, %s21
      %v264 = vld [vmem:[%s252] sm:$0x3f]
      %v265 = vld [vmem:[%s252 + $0x8] sm:$0x3f]
      %v266 = vld [vmem:[%s1] sm:$0xff]
      %v267 = vld [vmem:[%s1 + $0x8] sm:$0xff]
      %v268 = vld [vmem:[%s1 + $0x10] sm:$0xff]
      %v269 = vld [vmem:[%s1 + $0x18] sm:$0xff]
      %v270 = vld [vmem:[%s1 + $0x20] sm:$0xff]
      %v271 = vld [vmem:[%s1 + $0x28] sm:$0xff]
      %v272 = vld [vmem:[%s1 + $0x30] sm:$0xff]
      %v273 = vld [vmem:[%s1 + $0x38] sm:$0xff]
      %v274 = vld [vmem:[%s1 + $0x40] sm:$0xff]
      %v275 = vld [vmem:[%s1 + $0x48] sm:$0xff]
      %v276 = vld [vmem:[%s1 + $0x50] sm:$0xff]
      %v277 = vld [vmem:[%s1 + $0x58] sm:$0xff]
      %v278 = vld [vmem:[%s1 + $0x60] sm:$0xff]
      %v279 = vld [vmem:[%s1 + $0x68] sm:$0xff]
      %v280 = vld [vmem:[%s1 + $0x70] sm:$0xff]
      %v281 = vld [vmem:[%s1 + $0x78] sm:$0xff]
      %v282 = vld [vmem:[%s2] sm:$0xff]
      %v283 = vld [vmem:[%s2 + $0x8] sm:$0xff]
      %v284 = vld [vmem:[%s2 + $0x10] sm:$0xff]
      %v285 = vld [vmem:[%s2 + $0x18] sm:$0xff]
      %v286 = vld [vmem:[%s2 + $0x20] sm:$0xff]
      %v287 = vld [vmem:[%s2 + $0x28] sm:$0xff]
      %v288 = vld [vmem:[%s2 + $0x30] sm:$0xff]
      %v289 = vld [vmem:[%s2 + $0x38] sm:$0xff]
      %v290 = vld [vmem:[%s2 + $0x40] sm:$0xff]
      %v291 = vld [vmem:[%s2 + $0x48] sm:$0xff]
      %v292 = vld [vmem:[%s2 + $0x50] sm:$0xff]
      %v293 = vld [vmem:[%s2 + $0x58] sm:$0xff]
      %v294 = vld [vmem:[%s2 + $0x60] sm:$0xff]
      %v295 = vld [vmem:[%s2 + $0x68] sm:$0xff]
      %v296 = vld [vmem:[%s2 + $0x70] sm:$0xff]
      %v297 = vld [vmem:[%s2 + $0x78] sm:$0xff]
      %299 = vset.pattern.permute.xlu0 0
      %300 = vperm.xlu0 %299, %v282
      %v301 = vpop.permute.xlu0 %300
      %304 = vset.pattern.permute.xlu0 0
      %305 = vperm.xlu0 %304, %v283
      %v306 = vpop.permute.xlu0 %305
      %309 = vset.pattern.permute.xlu0 0
      %310 = vperm.xlu0 %309, %v284
      %v311 = vpop.permute.xlu0 %310
      %314 = vset.pattern.permute.xlu0 0
      %315 = vperm.xlu0 %314, %v285
      %v316 = vpop.permute.xlu0 %315
      %319 = vset.pattern.permute.xlu0 0
      %320 = vperm.xlu0 %319, %v286
      %v321 = vpop.permute.xlu0 %320
      %324 = vset.pattern.permute.xlu0 0
      %325 = vperm.xlu0 %324, %v287
      %v326 = vpop.permute.xlu0 %325
      %329 = vset.pattern.permute.xlu0 0
      %330 = vperm.xlu0 %329, %v288
      %v331 = vpop.permute.xlu0 %330
      %334 = vset.pattern.permute.xlu0 0
      %335 = vperm.xlu0 %334, %v289
      %v336 = vpop.permute.xlu0 %335
      %339 = vset.pattern.permute.xlu0 0
      %340 = vperm.xlu0 %339, %v290
      %v341 = vpop.permute.xlu0 %340
      %344 = vset.pattern.permute.xlu0 0
      %345 = vperm.xlu0 %344, %v291
      %v346 = vpop.permute.xlu0 %345
      %349 = vset.pattern.permute.xlu0 0
      %350 = vperm.xlu0 %349, %v292
      %v351 = vpop.permute.xlu0 %350
      %354 = vset.pattern.permute.xlu0 0
      %355 = vperm.xlu0 %354, %v293
      %v356 = vpop.permute.xlu0 %355
      %359 = vset.pattern.permute.xlu0 0
      %360 = vperm.xlu0 %359, %v294
      %v361 = vpop.permute.xlu0 %360
      %364 = vset.pattern.permute.xlu0 0
      %365 = vperm.xlu0 %364, %v295
      %v366 = vpop.permute.xlu0 %365
      %369 = vset.pattern.permute.xlu0 0
      %370 = vperm.xlu0 %369, %v296
      %v371 = vpop.permute.xlu0 %370
      %374 = vset.pattern.permute.xlu0 0
      %375 = vperm.xlu0 %374, %v297
      %v376 = vpop.permute.xlu0 %375
      %vm378 = vcmask 48128
      %v380 = vsel %vm378, %v266, 0
      %v383 = vsel %vm378, %v267, 0
      %v386 = vsel %vm378, %v268, 0
      %v389 = vsel %vm378, %v269, 0
      %v392 = vsel %vm378, %v270, 0
      %v395 = vsel %vm378, %v271, 0
      %v398 = vsel %vm378, %v272, 0
      %v401 = vsel %vm378, %v273, 0
      %v404 = vsel %vm378, %v274, 0
      %v407 = vsel %vm378, %v275, 0
      %v410 = vsel %vm378, %v276, 0
      %v413 = vsel %vm378, %v277, 0
      %v416 = vsel %vm378, %v278, 0
      %v419 = vsel %vm378, %v279, 0
      %v422 = vsel %vm378, %v280, 0
      %v425 = vsel %vm378, %v281, 0
      %vm427 = vcmask 1045504
      %v429 = vsel %vm427, %v264, 0
      %v432 = vsel %vm427, %v265, 0
      %434 = vmatprep.subr.mxu0 %v432
      %435 = vmatpush1.msra.mxu0 %v429
      %436 = vmatprep.subr.mxu0 0.0
      %437 = vmatpush1.msra.mxu0 0.0
      %438 = vmatprep.subr.mxu0 0.0
      %439 = vmatpush1.msra.mxu0 0.0
      %440 = vmatprep.subr.mxu0 0.0
      %441 = vmatpush1.msra.mxu0 0.0
      %442 = vmatprep.subr.mxu0 0.0
      %443 = vmatpush1.msra.mxu0 0.0
      %444 = vmatprep.subr.mxu0 0.0
      %445 = vmatpush1.msra.mxu0 0.0
      %446 = vmatprep.subr.mxu0 0.0
      %447 = vmatpush1.msra.mxu0 0.0
      %448 = vmatprep.subr.mxu0 0.0
      %449 = vmatpush1.msra.mxu0 0.0
      %450 = vmatprep.subr.mxu0 0.0
      %451 = vmatpush1.msra.mxu0 0.0
      %452 = vmatprep.subr.mxu0 0.0
      %453 = vmatpush1.msra.mxu0 0.0
      %454 = vmatprep.subr.mxu0 0.0
      %455 = vmatpush1.msra.mxu0 0.0
      %456 = vmatprep.subr.mxu0 0.0
      %457 = vmatpush1.msra.mxu0 0.0
      %458 = vmatprep.subr.mxu0 0.0
      %459 = vmatpush1.msra.mxu0 0.0
      %460 = vmatprep.subr.mxu0 0.0
      %461 = vmatpush1.msra.mxu0 0.0
      %462 = vmatprep.subr.mxu0 0.0
      %463 = vmatpush1.msra.mxu0 0.0
      %464 = vmatprep.subr.mxu0 0.0
      %465 = vmatpush1.msra.mxu0 0.0
      %466 = vmatprep.subr.mxu0 0.0
      %467 = vmatpush1.msra.mxu0 0.0
      %468 = vmatprep.subr.mxu0 0.0
      %469 = vmatpush1.msra.mxu0 0.0
      %470 = vmatprep.subr.mxu0 0.0
      %471 = vmatpush1.msra.mxu0 0.0
      %472 = vmatprep.subr.mxu0 0.0
      %473 = vmatpush1.msra.mxu0 0.0
      %474 = vmatprep.subr.mxu0 0.0
      %475 = vmatpush1.msra.mxu0 0.0
      %476 = vmatprep.subr.mxu0 0.0
      %477 = vmatpush1.msra.mxu0 0.0
      %478 = vmatprep.subr.mxu0 0.0
      %479 = vmatpush1.msra.mxu0 0.0
      %480 = vmatprep.subr.mxu0 0.0
      %481 = vmatpush1.msra.mxu0 0.0
      %482 = vmatprep.subr.mxu0 0.0
      %483 = vmatpush1.msra.mxu0 0.0
      %484 = vmatprep.subr.mxu0 0.0
      %485 = vmatpush1.msra.mxu0 0.0
      %486 = vmatprep.subr.mxu0 0.0
      %487 = vmatpush1.msra.mxu0 0.0
      %488 = vmatprep.subr.mxu0 0.0
      %489 = vmatpush1.msra.mxu0 0.0
      %490 = vmatprep.subr.mxu0 0.0
      %491 = vmatpush1.msra.mxu0 0.0
      %492 = vmatprep.subr.mxu0 0.0
      %493 = vmatpush1.msra.mxu0 0.0
      %494 = vmatprep.subr.mxu0 0.0
      %495 = vmatpush1.msra.mxu0 0.0
      %496 = vmatprep.subr.mxu0 0.0
      %497 = vmatpush1.msra.mxu0 0.0
      %498 = vmatprep.mubr.f32.mxu0 0.0
      %499 = vmatmul.mubr.f32.gmra.mrb[0].mxu0 %v380
      %v500 = vpop.f32.mrb[0].mxu0
      %v501 = vadd.f32 %v301, %v500
      %v502 = vpop.f32.mrb[0].mxu0
      %v503 = vadd.f32 %v301, %v502
      %504 = vmatprep.mubr.f32.mxu0 0.0
      %505 = vmatmul.mubr.f32.gmra.mrb[0].mxu0 %v383
      %v506 = vpop.f32.mrb[0].mxu0
      %v507 = vadd.f32 %v306, %v506
      %v508 = vpop.f32.mrb[0].mxu0
      %v509 = vadd.f32 %v306, %v508
      %510 = vmatprep.mubr.f32.mxu0 0.0
      %511 = vmatmul.mubr.f32.gmra.mrb[0].mxu0 %v386
      %v512 = vpop.f32.mrb[0].mxu0
      %v513 = vadd.f32 %v311, %v512
      %v514 = vpop.f32.mrb[0].mxu0
      %v515 = vadd.f32 %v311, %v514
      %516 = vmatprep.mubr.f32.mxu0 0.0
      %517 = vmatmul.mubr.f32.gmra.mrb[0].mxu0 %v389
      %v518 = vpop.f32.mrb[0].mxu0
      %v519 = vadd.f32 %v316, %v518
      %v520 = vpop.f32.mrb[0].mxu0
      %v521 = vadd.f32 %v316, %v520
      %522 = vmatprep.mubr.f32.mxu0 0.0
      %523 = vmatmul.mubr.f32.gmra.mrb[0].mxu0 %v392
      %v524 = vpop.f32.mrb[0].mxu0
      %v525 = vadd.f32 %v321, %v524
      %v526 = vpop.f32.mrb[0].mxu0
      %v527 = vadd.f32 %v321, %v526
      %528 = vmatprep.mubr.f32.mxu0 0.0
      %529 = vmatmul.mubr.f32.gmra.mrb[0].mxu0 %v395
      %v530 = vpop.f32.mrb[0].mxu0
      %v531 = vadd.f32 %v326, %v530
      %v532 = vpop.f32.mrb[0].mxu0
      %v533 = vadd.f32 %v326, %v532
      %534 = vmatprep.mubr.f32.mxu0 0.0
      %535 = vmatmul.mubr.f32.gmra.mrb[0].mxu0 %v398
      %v536 = vpop.f32.mrb[0].mxu0
      %v537 = vadd.f32 %v331, %v536
      %v538 = vpop.f32.mrb[0].mxu0
      %v539 = vadd.f32 %v331, %v538
      %540 = vmatprep.mubr.f32.mxu0 0.0
      %541 = vmatmul.mubr.f32.gmra.mrb[0].mxu0 %v401
      %v542 = vpop.f32.mrb[0].mxu0
      %v543 = vadd.f32 %v336, %v542
      %v544 = vpop.f32.mrb[0].mxu0
      %v545 = vadd.f32 %v336, %v544
      %546 = vmatprep.mubr.f32.mxu0 0.0
      %547 = vmatmul.mubr.f32.gmra.mrb[0].mxu0 %v404
      %v548 = vpop.f32.mrb[0].mxu0
      %v549 = vadd.f32 %v341, %v548
      %v550 = vpop.f32.mrb[0].mxu0
      %v551 = vadd.f32 %v341, %v550
      %552 = vmatprep.mubr.f32.mxu0 0.0
      %553 = vmatmul.mubr.f32.gmra.mrb[0].mxu0 %v407
      %v554 = vpop.f32.mrb[0].mxu0
      %v555 = vadd.f32 %v346, %v554
      %v556 = vpop.f32.mrb[0].mxu0
      %v557 = vadd.f32 %v346, %v556
      %558 = vmatprep.mubr.f32.mxu0 0.0
      %559 = vmatmul.mubr.f32.gmra.mrb[0].mxu0 %v410
      %v560 = vpop.f32.mrb[0].mxu0
      %v561 = vadd.f32 %v351, %v560
      %v562 = vpop.f32.mrb[0].mxu0
      %v563 = vadd.f32 %v351, %v562
      %564 = vmatprep.mubr.f32.mxu0 0.0
      %565 = vmatmul.mubr.f32.gmra.mrb[0].mxu0 %v413
      %v566 = vpop.f32.mrb[0].mxu0
      %v567 = vadd.f32 %v356, %v566
      %v568 = vpop.f32.mrb[0].mxu0
      %v569 = vadd.f32 %v356, %v568
      %570 = vmatprep.mubr.f32.mxu0 0.0
      %571 = vmatmul.mubr.f32.gmra.mrb[0].mxu0 %v416
      %v572 = vpop.f32.mrb[0].mxu0
      %v573 = vadd.f32 %v361, %v572
      %v574 = vpop.f32.mrb[0].mxu0
      %v575 = vadd.f32 %v361, %v574
      %576 = vmatprep.mubr.f32.mxu0 0.0
      %577 = vmatmul.mubr.f32.gmra.mrb[0].mxu0 %v419
      %v578 = vpop.f32.mrb[0].mxu0
      %v579 = vadd.f32 %v366, %v578
      %v580 = vpop.f32.mrb[0].mxu0
      %v581 = vadd.f32 %v366, %v580
      %582 = vmatprep.mubr.f32.mxu0 0.0
      %583 = vmatmul.mubr.f32.gmra.mrb[0].mxu0 %v422
      %v584 = vpop.f32.mrb[0].mxu0
      %v585 = vadd.f32 %v371, %v584
      %v586 = vpop.f32.mrb[0].mxu0
      %v587 = vadd.f32 %v371, %v586
      %588 = vmatprep.mubr.f32.mxu0 0.0
      %589 = vmatmul.mubr.f32.gmra.mrb[0].mxu0 %v425
      %v590 = vpop.f32.mrb[0].mxu0
      %v591 = vadd.f32 %v376, %v590
      %v592 = vpop.f32.mrb[0].mxu0
      %v593 = vadd.f32 %v376, %v592
      %594 = vdwg.mxu0
      %v595 = vmax.f32 %v501, 0.0
      %v596 = vmax.f32 %v503, 0.0
      %v597 = vmax.f32 %v507, 0.0
      %v598 = vmax.f32 %v509, 0.0
      %v599 = vmax.f32 %v513, 0.0
      %v600 = vmax.f32 %v515, 0.0
      %v601 = vmax.f32 %v519, 0.0
      %v602 = vmax.f32 %v521, 0.0
      %v603 = vmax.f32 %v525, 0.0
      %v604 = vmax.f32 %v527, 0.0
      %v605 = vmax.f32 %v531, 0.0
      %v606 = vmax.f32 %v533, 0.0
      %v607 = vmax.f32 %v537, 0.0
      %v608 = vmax.f32 %v539, 0.0
      %v609 = vmax.f32 %v543, 0.0
      %v610 = vmax.f32 %v545, 0.0
      %v611 = vmax.f32 %v549, 0.0
      %v612 = vmax.f32 %v551, 0.0
      %v613 = vmax.f32 %v555, 0.0
      %v614 = vmax.f32 %v557, 0.0
      %v615 = vmax.f32 %v561, 0.0
      %v616 = vmax.f32 %v563, 0.0
      %v617 = vmax.f32 %v567, 0.0
      %v618 = vmax.f32 %v569, 0.0
      %v619 = vmax.f32 %v573, 0.0
      %v620 = vmax.f32 %v575, 0.0
      %v621 = vmax.f32 %v579, 0.0
      %v622 = vmax.f32 %v581, 0.0
      %v623 = vmax.f32 %v585, 0.0
      %v624 = vmax.f32 %v587, 0.0
      %v625 = vmax.f32 %v591, 0.0
      %v626 = vmax.f32 %v593, 0.0
      %v627 = vld [vmem:[%s3] sm:$0xff]
      %v628 = vld [vmem:[%s3 + $0x8] sm:$0xff]
      %v629 = vld [vmem:[%s3 + $0x10] sm:$0xff]
      %v630 = vld [vmem:[%s3 + $0x18] sm:$0xff]
      %v631 = vld [vmem:[%s3 + $0x20] sm:$0xff]
      %v632 = vld [vmem:[%s3 + $0x28] sm:$0xff]
      %v633 = vld [vmem:[%s3 + $0x30] sm:$0xff]
      %v634 = vld [vmem:[%s3 + $0x38] sm:$0xff]
      %v635 = vld [vmem:[%s3 + $0x40] sm:$0xff]
      %v636 = vld [vmem:[%s3 + $0x48] sm:$0xff]
      %v637 = vld [vmem:[%s3 + $0x50] sm:$0xff]
      %v638 = vld [vmem:[%s3 + $0x58] sm:$0xff]
      %v639 = vld [vmem:[%s3 + $0x60] sm:$0xff]
      %v640 = vld [vmem:[%s3 + $0x68] sm:$0xff]
      %v641 = vld [vmem:[%s3 + $0x70] sm:$0xff]
      %v642 = vld [vmem:[%s3 + $0x78] sm:$0xff]
      %v643 = vld [vmem:[%s4] sm:$0xff]
      %v644 = vld [vmem:[%s4 + $0x8] sm:$0xff]
      %v645 = vld [vmem:[%s4 + $0x10] sm:$0xff]
      %v646 = vld [vmem:[%s4 + $0x18] sm:$0xff]
      %v647 = vld [vmem:[%s4 + $0x20] sm:$0xff]
      %v648 = vld [vmem:[%s4 + $0x28] sm:$0xff]
      %v649 = vld [vmem:[%s4 + $0x30] sm:$0xff]
      %v650 = vld [vmem:[%s4 + $0x38] sm:$0xff]
      %v651 = vld [vmem:[%s4 + $0x40] sm:$0xff]
      %v652 = vld [vmem:[%s4 + $0x48] sm:$0xff]
      %v653 = vld [vmem:[%s4 + $0x50] sm:$0xff]
      %v654 = vld [vmem:[%s4 + $0x58] sm:$0xff]
      %v655 = vld [vmem:[%s4 + $0x60] sm:$0xff]
      %v656 = vld [vmem:[%s4 + $0x68] sm:$0xff]
      %v657 = vld [vmem:[%s4 + $0x70] sm:$0xff]
      %v658 = vld [vmem:[%s4 + $0x78] sm:$0xff]
      %660 = vset.pattern.permute.xlu0 0
      %661 = vperm.xlu0 %660, %v643
      %v662 = vpop.permute.xlu0 %661
      %665 = vset.pattern.permute.xlu0 0
      %666 = vperm.xlu0 %665, %v644
      %v667 = vpop.permute.xlu0 %666
      %670 = vset.pattern.permute.xlu0 0
      %671 = vperm.xlu0 %670, %v645
      %v672 = vpop.permute.xlu0 %671
      %675 = vset.pattern.permute.xlu0 0
      %676 = vperm.xlu0 %675, %v646
      %v677 = vpop.permute.xlu0 %676
      %680 = vset.pattern.permute.xlu0 0
      %681 = vperm.xlu0 %680, %v647
      %v682 = vpop.permute.xlu0 %681
      %685 = vset.pattern.permute.xlu0 0
      %686 = vperm.xlu0 %685, %v648
      %v687 = vpop.permute.xlu0 %686
      %690 = vset.pattern.permute.xlu0 0
      %691 = vperm.xlu0 %690, %v649
      %v692 = vpop.permute.xlu0 %691
      %695 = vset.pattern.permute.xlu0 0
      %696 = vperm.xlu0 %695, %v650
      %v697 = vpop.permute.xlu0 %696
      %700 = vset.pattern.permute.xlu0 0
      %701 = vperm.xlu0 %700, %v651
      %v702 = vpop.permute.xlu0 %701
      %705 = vset.pattern.permute.xlu0 0
      %706 = vperm.xlu0 %705, %v652
      %v707 = vpop.permute.xlu0 %706
      %710 = vset.pattern.permute.xlu0 0
      %711 = vperm.xlu0 %710, %v653
      %v712 = vpop.permute.xlu0 %711
      %715 = vset.pattern.permute.xlu0 0
      %716 = vperm.xlu0 %715, %v654
      %v717 = vpop.permute.xlu0 %716
      %720 = vset.pattern.permute.xlu0 0
      %721 = vperm.xlu0 %720, %v655
      %v722 = vpop.permute.xlu0 %721
      %725 = vset.pattern.permute.xlu0 0
      %726 = vperm.xlu0 %725, %v656
      %v727 = vpop.permute.xlu0 %726
      %730 = vset.pattern.permute.xlu0 0
      %731 = vperm.xlu0 %730, %v657
      %v732 = vpop.permute.xlu0 %731
      %735 = vset.pattern.permute.xlu0 0
      %736 = vperm.xlu0 %735, %v658
      %v737 = vpop.permute.xlu0 %736
      %739 = vmatprep.subr.mxu0 %v596
      %740 = vmatpush1.msra.mxu0 %v595
      %741 = vmatprep.subr.mxu0 %v598
      %742 = vmatpush1.msra.mxu0 %v597
      %743 = vmatprep.subr.mxu0 %v600
      %744 = vmatpush1.msra.mxu0 %v599
      %745 = vmatprep.subr.mxu0 %v602
      %746 = vmatpush1.msra.mxu0 %v601
      %747 = vmatprep.subr.mxu0 %v604
      %748 = vmatpush1.msra.mxu0 %v603
      %749 = vmatprep.subr.mxu0 %v606
      %750 = vmatpush1.msra.mxu0 %v605
      %751 = vmatprep.subr.mxu0 %v608
      %752 = vmatpush1.msra.mxu0 %v607
      %753 = vmatprep.subr.mxu0 %v610
      %754 = vmatpush1.msra.mxu0 %v609
      %755 = vmatprep.subr.mxu0 %v612
      %756 = vmatpush1.msra.mxu0 %v611
      %757 = vmatprep.subr.mxu0 %v614
      %758 = vmatpush1.msra.mxu0 %v613
      %759 = vmatprep.subr.mxu0 %v616
      %760 = vmatpush1.msra.mxu0 %v615
      %761 = vmatprep.subr.mxu0 %v618
      %762 = vmatpush1.msra.mxu0 %v617
      %763 = vmatprep.subr.mxu0 %v620
      %764 = vmatpush1.msra.mxu0 %v619
      %765 = vmatprep.subr.mxu0 %v622
      %766 = vmatpush1.msra.mxu0 %v621
      %767 = vmatprep.subr.mxu0 %v624
      %768 = vmatpush1.msra.mxu0 %v623
      %769 = vmatprep.subr.mxu0 %v626
      %770 = vmatpush1.msra.mxu0 %v625
      %771 = vmatprep.subr.mxu0 0.0
      %772 = vmatpush1.msra.mxu0 0.0
      %773 = vmatprep.subr.mxu0 0.0
      %774 = vmatpush1.msra.mxu0 0.0
      %775 = vmatprep.subr.mxu0 0.0
      %776 = vmatpush1.msra.mxu0 0.0
      %777 = vmatprep.subr.mxu0 0.0
      %778 = vmatpush1.msra.mxu0 0.0
      %779 = vmatprep.subr.mxu0 0.0
      %780 = vmatpush1.msra.mxu0 0.0
      %781 = vmatprep.subr.mxu0 0.0
      %782 = vmatpush1.msra.mxu0 0.0
      %783 = vmatprep.subr.mxu0 0.0
      %784 = vmatpush1.msra.mxu0 0.0
      %785 = vmatprep.subr.mxu0 0.0
      %786 = vmatpush1.msra.mxu0 0.0
      %787 = vmatprep.subr.mxu0 0.0
      %788 = vmatpush1.msra.mxu0 0.0
      %789 = vmatprep.subr.mxu0 0.0
      %790 = vmatpush1.msra.mxu0 0.0
      %791 = vmatprep.subr.mxu0 0.0
      %792 = vmatpush1.msra.mxu0 0.0
      %793 = vmatprep.subr.mxu0 0.0
      %794 = vmatpush1.msra.mxu0 0.0
      %795 = vmatprep.subr.mxu0 0.0
      %796 = vmatpush1.msra.mxu0 0.0
      %797 = vmatprep.subr.mxu0 0.0
      %798 = vmatpush1.msra.mxu0 0.0
      %799 = vmatprep.subr.mxu0 0.0
      %800 = vmatpush1.msra.mxu0 0.0
      %801 = vmatprep.subr.mxu0 0.0
      %802 = vmatpush1.msra.mxu0 0.0
      %803 = vmatprep.mubr.f32.mxu0 0.0
      %804 = vmatmul.mubr.f32.gmra.mrb[0].mxu0 %v627
      %v805 = vpop.f32.mrb[0].mxu0
      %v806 = vadd.f32 %v662, %v805
      %v807 = vpop.f32.mrb[0].mxu0
      %v808 = vadd.f32 %v662, %v807
      %809 = vmatprep.mubr.f32.mxu0 0.0
      %810 = vmatmul.mubr.f32.gmra.mrb[0].mxu0 %v628
      %v811 = vpop.f32.mrb[0].mxu0
      %v812 = vadd.f32 %v667, %v811
      %v813 = vpop.f32.mrb[0].mxu0
      %v814 = vadd.f32 %v667, %v813
      %815 = vmatprep.mubr.f32.mxu0 0.0
      %816 = vmatmul.mubr.f32.gmra.mrb[0].mxu0 %v629
      %v817 = vpop.f32.mrb[0].mxu0
      %v818 = vadd.f32 %v672, %v817
      %v819 = vpop.f32.mrb[0].mxu0
      %v820 = vadd.f32 %v672, %v819
      %821 = vmatprep.mubr.f32.mxu0 0.0
      %822 = vmatmul.mubr.f32.gmra.mrb[0].mxu0 %v630
      %v823 = vpop.f32.mrb[0].mxu0
      %v824 = vadd.f32 %v677, %v823
      %v825 = vpop.f32.mrb[0].mxu0
      %v826 = vadd.f32 %v677, %v825
      %827 = vmatprep.mubr.f32.mxu0 0.0
      %828 = vmatmul.mubr.f32.gmra.mrb[0].mxu0 %v631
      %v829 = vpop.f32.mrb[0].mxu0
      %v830 = vadd.f32 %v682, %v829
      %v831 = vpop.f32.mrb[0].mxu0
      %v832 = vadd.f32 %v682, %v831
      %833 = vmatprep.mubr.f32.mxu0 0.0
      %834 = vmatmul.mubr.f32.gmra.mrb[0].mxu0 %v632
      %v835 = vpop.f32.mrb[0].mxu0
      %v836 = vadd.f32 %v687, %v835
      %v837 = vpop.f32.mrb[0].mxu0
      %v838 = vadd.f32 %v687, %v837
      %839 = vmatprep.mubr.f32.mxu0 0.0
      %840 = vmatmul.mubr.f32.gmra.mrb[0].mxu0 %v633
      %v841 = vpop.f32.mrb[0].mxu0
      %v842 = vadd.f32 %v692, %v841
      %v843 = vpop.f32.mrb[0].mxu0
      %v844 = vadd.f32 %v692, %v843
      %845 = vmatprep.mubr.f32.mxu0 0.0
      %846 = vmatmul.mubr.f32.gmra.mrb[0].mxu0 %v634
      %v847 = vpop.f32.mrb[0].mxu0
      %v848 = vadd.f32 %v697, %v847
      %v849 = vpop.f32.mrb[0].mxu0
      %v850 = vadd.f32 %v697, %v849
      %851 = vmatprep.mubr.f32.mxu0 0.0
      %852 = vmatmul.mubr.f32.gmra.mrb[0].mxu0 %v635
      %v853 = vpop.f32.mrb[0].mxu0
      %v854 = vadd.f32 %v702, %v853
      %v855 = vpop.f32.mrb[0].mxu0
      %v856 = vadd.f32 %v702, %v855
      %857 = vmatprep.mubr.f32.mxu0 0.0
      %858 = vmatmul.mubr.f32.gmra.mrb[0].mxu0 %v636
      %v859 = vpop.f32.mrb[0].mxu0
      %v860 = vadd.f32 %v707, %v859
      %v861 = vpop.f32.mrb[0].mxu0
      %v862 = vadd.f32 %v707, %v861
      %863 = vmatprep.mubr.f32.mxu0 0.0
      %864 = vmatmul.mubr.f32.gmra.mrb[0].mxu0 %v637
      %v865 = vpop.f32.mrb[0].mxu0
      %v866 = vadd.f32 %v712, %v865
      %v867 = vpop.f32.mrb[0].mxu0
      %v868 = vadd.f32 %v712, %v867
      %869 = vmatprep.mubr.f32.mxu0 0.0
      %870 = vmatmul.mubr.f32.gmra.mrb[0].mxu0 %v638
      %v871 = vpop.f32.mrb[0].mxu0
      %v872 = vadd.f32 %v717, %v871
      %v873 = vpop.f32.mrb[0].mxu0
      %v874 = vadd.f32 %v717, %v873
      %875 = vmatprep.mubr.f32.mxu0 0.0
      %876 = vmatmul.mubr.f32.gmra.mrb[0].mxu0 %v639
      %v877 = vpop.f32.mrb[0].mxu0
      %v878 = vadd.f32 %v722, %v877
      %v879 = vpop.f32.mrb[0].mxu0
      %v880 = vadd.f32 %v722, %v879
      %881 = vmatprep.mubr.f32.mxu0 0.0
      %882 = vmatmul.mubr.f32.gmra.mrb[0].mxu0 %v640
      %v883 = vpop.f32.mrb[0].mxu0
      %v884 = vadd.f32 %v727, %v883
      %v885 = vpop.f32.mrb[0].mxu0
      %v886 = vadd.f32 %v727, %v885
      %887 = vmatprep.mubr.f32.mxu0 0.0
      %888 = vmatmul.mubr.f32.gmra.mrb[0].mxu0 %v641
      %v889 = vpop.f32.mrb[0].mxu0
      %v890 = vadd.f32 %v732, %v889
      %v891 = vpop.f32.mrb[0].mxu0
      %v892 = vadd.f32 %v732, %v891
      %893 = vmatprep.mubr.f32.mxu0 0.0
      %894 = vmatmul.mubr.f32.gmra.mrb[0].mxu0 %v642
      %v895 = vpop.f32.mrb[0].mxu0
      %v896 = vadd.f32 %v737, %v895
      %v897 = vpop.f32.mrb[0].mxu0
      %v898 = vadd.f32 %v737, %v897
      %899 = vdwg.mxu0
      %v900 = vmax.f32 %v806, 0.0
      %v901 = vmax.f32 %v808, 0.0
      %v902 = vmax.f32 %v812, 0.0
      %v903 = vmax.f32 %v814, 0.0
      %v904 = vmax.f32 %v818, 0.0
      %v905 = vmax.f32 %v820, 0.0
      %v906 = vmax.f32 %v824, 0.0
      %v907 = vmax.f32 %v826, 0.0
      %v908 = vmax.f32 %v830, 0.0
      %v909 = vmax.f32 %v832, 0.0
      %v910 = vmax.f32 %v836, 0.0
      %v911 = vmax.f32 %v838, 0.0
      %v912 = vmax.f32 %v842, 0.0
      %v913 = vmax.f32 %v844, 0.0
      %v914 = vmax.f32 %v848, 0.0
      %v915 = vmax.f32 %v850, 0.0
      %v916 = vmax.f32 %v854, 0.0
      %v917 = vmax.f32 %v856, 0.0
      %v918 = vmax.f32 %v860, 0.0
      %v919 = vmax.f32 %v862, 0.0
      %v920 = vmax.f32 %v866, 0.0
      %v921 = vmax.f32 %v868, 0.0
      %v922 = vmax.f32 %v872, 0.0
      %v923 = vmax.f32 %v874, 0.0
      %v924 = vmax.f32 %v878, 0.0
      %v925 = vmax.f32 %v880, 0.0
      %v926 = vmax.f32 %v884, 0.0
      %v927 = vmax.f32 %v886, 0.0
      %v928 = vmax.f32 %v890, 0.0
      %v929 = vmax.f32 %v892, 0.0
      %v930 = vmax.f32 %v896, 0.0
      %v931 = vmax.f32 %v898, 0.0
      %v932 = vadd.f32 %v900, %v916
      %v933 = vadd.f32 %v901, %v917
      %v934 = vadd.f32 %v902, %v918
      %v935 = vadd.f32 %v903, %v919
      %v936 = vadd.f32 %v904, %v920
      %v937 = vadd.f32 %v905, %v921
      %v938 = vadd.f32 %v906, %v922
      %v939 = vadd.f32 %v907, %v923
      %v940 = vadd.f32 %v908, %v924
      %v941 = vadd.f32 %v909, %v925
      %v942 = vadd.f32 %v910, %v926
      %v943 = vadd.f32 %v911, %v927
      %v944 = vadd.f32 %v912, %v928
      %v945 = vadd.f32 %v913, %v929
      %v946 = vadd.f32 %v914, %v930
      %v947 = vadd.f32 %v915, %v931
      %948 = vst [vmem:[%s262] sm:$0xff] %v932
      %949 = vst [vmem:[%s262 + $0x8] sm:$0xff] %v933
      %950 = vst [vmem:[%s262 + $0x10] sm:$0xff] %v934
      %951 = vst [vmem:[%s262 + $0x18] sm:$0xff] %v935
      %952 = vst [vmem:[%s262 + $0x20] sm:$0xff] %v936
      %953 = vst [vmem:[%s262 + $0x28] sm:$0xff] %v937
      %954 = vst [vmem:[%s262 + $0x30] sm:$0xff] %v938
      %955 = vst [vmem:[%s262 + $0x38] sm:$0xff] %v939
      %956 = vst [vmem:[%s262 + $0x40] sm:$0xff] %v940
      %957 = vst [vmem:[%s262 + $0x48] sm:$0xff] %v941
      %958 = vst [vmem:[%s262 + $0x50] sm:$0xff] %v942
      %959 = vst [vmem:[%s262 + $0x58] sm:$0xff] %v943
      %960 = vst [vmem:[%s262 + $0x60] sm:$0xff] %v944
      %961 = vst [vmem:[%s262 + $0x68] sm:$0xff] %v945
      %962 = vst [vmem:[%s262 + $0x70] sm:$0xff] %v946
      %963 = vst [vmem:[%s262 + $0x78] sm:$0xff] %v947
      %s964 = smul.u32 2, %s21
      %p965 = scmp.lt.s32.totalorder %s20, 1
      %s966 = scalar_select %p965, %s20, 1
      %p967 = scmp.lt.s32.totalorder %s964, 1
      %s968 = scalar_select %p967, %s964, 1
      %s969 = smul.addr %s966, 16
      %s970 = sadd.s32 %s968, %s969
      %s971 = smul.addr %s970, 8
      %s972 = scalar_lea.vmem %s5, %s971
      // Predicated region
      $region41: #{block_joint_input_forward.1} parent=39 // pred_check
        %p973 = pneg %p160
      $region42: #{block_joint_input_forward.1} parent=39 // pred_check_branch
        %975 = sbr.rel (%p973) target = $region44
      $region43: #{block_joint_input_forward.1} parent=39 // pred_region
        %s976 = smul.u32 2, %s21
      $region44: #{block_joint_input_forward.1} parent=39 // pred_fallthru
        _
    $region40: #{block_joint_input_forward.1} parent=5 // pred_fallthru
      _
    %p977 = scmp.le.s32.totalorder 2, %s11
    // Predicated region
    $region45: #{block_joint_input_forward.1} parent=5 // pred_check
      %p978 = pneg %p977
    $region46: #{block_joint_input_forward.1} parent=5 // pred_check_branch
      %980 = sbr.rel (%p978) target = $region48
    $region47: #{block_joint_input_forward.1} parent=5 // pred_region
      %s981 = ssub.s32 %s11, 2
      // Predicated region
      $region49: #{block_joint_input_forward.1} parent=47 // pred_check
        %p982 = pneg %p166
      $region50: #{block_joint_input_forward.1} parent=47 // pred_check_branch
        %984 = sbr.rel (%p982) target = $region52
      $region51: #{block_joint_input_forward.1} parent=47 // pred_region
        %s985 = smul.u32 2, %s23
        %p986 = scmp.lt.s32.totalorder %s22, 1
        %s987 = scalar_select %p986, %s22, 1
        %p988 = scmp.lt.s32.totalorder %s985, 1
        %s989 = scalar_select %p988, %s985, 1
        %s990 = smul.addr %s987, 16
        %s991 = sadd.s32 %s989, %s990
        %s992 = smul.addr %s991, 8
        %s993 = scalar_lea.vmem %s5, %s992
      $region52: #{block_joint_input_forward.1} parent=47 // pred_fallthru
        _
    $region48: #{block_joint_input_forward.1} parent=5 // pred_fallthru
      _
  $region6: #{block_joint_input_forward.1} parent=0 // loop_footer
    %s15 = sadd.s32 1, %s11
  $region7: #{block_joint_input_forward.1} parent=0 // loop_footer_branch
    %10 = sbr.rel target = $region3
  $region8: #{block_joint_input_forward.1} parent=0 // loop_exit
    _

</llo_original>
